<compile_context>
chip_gen: v6e
topology: v6e:2x2x1
jax: 0.10.0
libtpu: 0.0.40
codegen_flags: <defaults>
</compile_context>

<pallas_src>
import functools

import jax
import jax.numpy as jnp
import numpy as np
from jax.experimental import pallas as pl
from jax.experimental.pallas import tpu as pltpu


def _tail_reduction_kernel(x_ref, out_ref, *, koef: float, head_len: int,
                           batch: int, tile_b: int):
    # x_ref:   (TILE_B, N) input block in VMEM (native dtype).
    # out_ref: (TILE_B, 1) per-row loss block in VMEM (padded rows -> 0).
    x = x_ref[...]
    bt, n = x.shape
    neg_inf = jnp.asarray(-jnp.inf, dtype=x.dtype)

    # Row totals; tail_sum is reconstructed later as total - head_sum.
    total = jnp.sum(x, axis=1, keepdims=True).astype(jnp.float32)      # (bt, 1)

    head_len_f = jnp.float32(head_len)

    # ---- pass 0: row max + its multiplicity (tie handling) ----
    m = jnp.max(x, axis=1, keepdims=True)                              # (bt, 1)
    is_max = x == m                                                    # (bt, n)
    cnt = jnp.sum(is_max.astype(jnp.float32), axis=1, keepdims=True)   # (bt, 1)
    m1 = m.astype(jnp.float32)                                         # head max
    take = jnp.minimum(cnt, head_len_f)
    head_sum = take * m1
    kth = m1                                                           # head min so far
    remaining = head_len_f - take                                      # head slots left

    if head_len > 1:
        work = jnp.where(is_max, neg_inf, x)
        # ---- middle passes 1 .. head_len-2 ----
        for _ in range(head_len - 2):
            m = jnp.max(work, axis=1, keepdims=True)
            is_max = work == m
            cnt = jnp.sum(is_max.astype(jnp.float32), axis=1, keepdims=True)
            mf = m.astype(jnp.float32)
            take = jnp.minimum(cnt, remaining)
            has = remaining > 0.0
            head_sum = head_sum + jnp.where(has, take * mf, 0.0)
            kth = jnp.where(has, mf, kth)
            remaining = remaining - take
            work = jnp.where(is_max, neg_inf, work)
        # ---- last pass: remaining is 0 or 1 here, so take == remaining ----
        # Only one max reduction; no multiplicity count, no masking needed.
        m_last = jnp.max(work, axis=1, keepdims=True).astype(jnp.float32)
        has = remaining > 0.0
        head_sum = head_sum + jnp.where(has, m_last, 0.0)
        kth = jnp.where(has, m_last, kth)

    tail_sum = total - head_sum                        # (bt, 1)
    per_row = jnp.float32(koef) * tail_sum + (m1 - kth)

    # Zero out rows that are padding of a ragged last tile.
    row = jax.lax.broadcasted_iota(jnp.int32, (bt, 1), 0)
    valid = (pl.program_id(0) * tile_b + row) < batch
    out_ref[...] = jnp.where(valid, per_row, 0.0)


def _round_up(v: int, m: int) -> int:
    return (v + m - 1) // m * m


def _choose_tile_b(batch: int, n: int, itemsize: int) -> int:
    # ~2 MiB per input block, multiple of 8 rows, no row cap.  Double-buffered
    # input (2x) plus ~3x-block of in-kernel temporaries stays under the 16 MiB
    # scoped-VMEM default of v5e and the 32 MiB default of v6e/v7x.
    bytes_per_row = max(1, n * max(int(itemsize), 1))
    tile = (2 * 1024 * 1024) // bytes_per_row
    tile = max(8, (tile // 8) * 8)
    return min(tile, _round_up(batch, 8))


def tail_reduction(x: jax.Array, koef: float = 1.0, head_len: int = 3,
                   tile_b: int | None = None) -> jax.Array:
    """Pallas TPU implementation of TailReduction.forward. Returns a scalar."""
    assert x.ndim == 2, "expected x of shape (batch, num_aspects)"
    B, N = x.shape
    assert 0 < head_len < N

    if tile_b is None:
        tile_b = _choose_tile_b(B, N, x.dtype.itemsize)
    tile_b = max(8, _round_up(int(tile_b), 8))
    num_tiles = pl.cdiv(B, tile_b)
    out_rows = num_tiles * tile_b

    kernel = functools.partial(
        _tail_reduction_kernel,
        koef=float(koef), head_len=int(head_len), batch=int(B), tile_b=int(tile_b),
    )

    cost = pl.CostEstimate(
        flops=int((5 * head_len + 2) * B * N),
        transcendentals=0,
        bytes_accessed=int(B * N * x.dtype.itemsize + out_rows * 4),
    )

    per_row = pl.pallas_call(
        kernel,
        out_shape=jax.ShapeDtypeStruct((out_rows, 1), jnp.float32),
        grid=(num_tiles,),
        in_specs=[pl.BlockSpec((tile_b, N), lambda i: (i, 0))],
        out_specs=pl.BlockSpec((tile_b, 1), lambda i: (i, 0)),
        compiler_params=pltpu.CompilerParams(dimension_semantics=("parallel",)),
        cost_estimate=cost,
    )(x)

    out = jnp.sum(per_row)
    if jnp.issubdtype(x.dtype, jnp.floating):
        out = out.astype(x.dtype)          # match the module's output dtype
    return out


def _reference(x: np.ndarray, koef: float = 1.0, head_len: int = 3) -> float:
    xs = np.sort(x, axis=1)
    head = xs[:, -head_len:]
    tail = xs[:, :-head_len]
    loss = koef * tail.sum(axis=1)
    loss_head = head.max(axis=1) - head.min(axis=1)
    return float((loss + loss_head).sum())


if __name__ == "__main__":
    key = jax.random.PRNGKey(0)
    koef, head_len = 1.0, 3

    # Small deterministic shapes consistent with the module (batch, num_aspects).
    B, N = 20, 128
    x = jax.random.normal(key, (B, N), dtype=jnp.float32)

    # Auto-chosen tile (single block at this small batch).
    out_auto = jax.block_until_ready(tail_reduction(x, koef=koef, head_len=head_len))
    # Forced tiny tile: exercises a multi-step grid plus a ragged, masked last tile.
    out_grid = jax.block_until_ready(
        tail_reduction(x, koef=koef, head_len=head_len, tile_b=8))

    ref = _reference(np.asarray(x), koef=koef, head_len=head_len)
    assert np.allclose(float(out_auto), ref, rtol=1e-5, atol=1e-4), (float(out_auto), ref)
    assert np.allclose(float(out_grid), ref, rtol=1e-5, atol=1e-4), (float(out_grid), ref)

    print("KERNEL_OK")
</pallas_src>

<mosaic_0001>
module attributes {stable_mosaic.version = 11 : i64} {
  func.func @_tail_reduction_kernel(%arg0: i32, %arg1: memref<24x128xf32, #tpu.memory_space<vmem>>, %arg2: memref<24x1xf32, #tpu.memory_space<vmem>>) attributes {dimension_semantics = [#tpu.dimension_semantics<parallel>], iteration_bounds = array<i64: 1>, scalar_prefetch = 0 : i64, scratch_operands = 0 : i64, tpu.core_type = #tpu.core_type<tc>, window_params = [{transform_indices = @transform_0, window_bounds = array<i64: 24, 128>}, {transform_indices = @transform_1, window_bounds = array<i64: 24, 1>}]} {
    %c0 = arith.constant 0 : index
    %c0_0 = arith.constant 0 : index
    %0 = vector.load %arg1[%c0, %c0_0] : memref<24x128xf32, #tpu.memory_space<vmem>>, vector<24x128xf32>
    %cst = arith.constant dense<0.000000e+00> : vector<24xf32>
    %1 = vector.multi_reduction <add>, %0, %cst [1] : vector<24x128xf32> to vector<24xf32>
    %2 = vector.shape_cast %1 : vector<24xf32> to vector<24x1xf32>
    %cst_1 = arith.constant dense<0xFF800000> : vector<24xf32>
    %3 = vector.multi_reduction <maximumf>, %0, %cst_1 [1] : vector<24x128xf32> to vector<24xf32>
    %4 = vector.shape_cast %3 : vector<24xf32> to vector<24x1xf32>
    %5 = vector.broadcast %4 : vector<24x1xf32> to vector<24x128xf32>
    %6 = arith.cmpf oeq, %0, %5 : vector<24x128xf32>
    %7 = arith.extui %6 : vector<24x128xi1> to vector<24x128xi32>
    %8 = arith.sitofp %7 : vector<24x128xi32> to vector<24x128xf32>
    %cst_2 = arith.constant dense<0.000000e+00> : vector<24xf32>
    %9 = vector.multi_reduction <add>, %8, %cst_2 [1] : vector<24x128xf32> to vector<24xf32>
    %10 = vector.shape_cast %9 : vector<24xf32> to vector<24x1xf32>
    %cst_3 = arith.constant 3.000000e+00 : f32
    %11 = vector.broadcast %cst_3 : f32 to vector<24x1xf32>
    %12 = arith.minimumf %10, %11 : vector<24x1xf32>
    %13 = arith.mulf %12, %4 : vector<24x1xf32>
    %cst_4 = arith.constant 3.000000e+00 : f32
    %14 = vector.broadcast %cst_4 : f32 to vector<24x1xf32>
    %15 = arith.subf %14, %12 : vector<24x1xf32>
    %cst_5 = arith.constant 0xFF800000 : f32
    %16 = vector.broadcast %cst_5 : f32 to vector<24x128xf32>
    %17 = arith.select %6, %16, %0 : vector<24x128xi1>, vector<24x128xf32>
    %cst_6 = arith.constant dense<0xFF800000> : vector<24xf32>
    %18 = vector.multi_reduction <maximumf>, %17, %cst_6 [1] : vector<24x128xf32> to vector<24xf32>
    %19 = vector.shape_cast %18 : vector<24xf32> to vector<24x1xf32>
    %20 = vector.broadcast %19 : vector<24x1xf32> to vector<24x128xf32>
    %21 = arith.cmpf oeq, %17, %20 : vector<24x128xf32>
    %22 = arith.extui %21 : vector<24x128xi1> to vector<24x128xi32>
    %23 = arith.sitofp %22 : vector<24x128xi32> to vector<24x128xf32>
    %cst_7 = arith.constant dense<0.000000e+00> : vector<24xf32>
    %24 = vector.multi_reduction <add>, %23, %cst_7 [1] : vector<24x128xf32> to vector<24xf32>
    %25 = vector.shape_cast %24 : vector<24xf32> to vector<24x1xf32>
    %26 = arith.minimumf %25, %15 : vector<24x1xf32>
    %cst_8 = arith.constant 0.000000e+00 : f32
    %27 = vector.broadcast %cst_8 : f32 to vector<24x1xf32>
    %28 = arith.cmpf ogt, %15, %27 : vector<24x1xf32>
    %29 = arith.mulf %26, %19 : vector<24x1xf32>
    %cst_9 = arith.constant 0.000000e+00 : f32
    %30 = vector.broadcast %cst_9 : f32 to vector<24x1xf32>
    %31 = arith.select %28, %29, %30 : vector<24x1xi1>, vector<24x1xf32>
    %32 = arith.addf %13, %31 : vector<24x1xf32>
    %33 = arith.select %28, %19, %4 : vector<24x1xi1>, vector<24x1xf32>
    %34 = arith.subf %15, %26 : vector<24x1xf32>
    %cst_10 = arith.constant 0xFF800000 : f32
    %35 = vector.broadcast %cst_10 : f32 to vector<24x128xf32>
    %36 = arith.select %21, %35, %17 : vector<24x128xi1>, vector<24x128xf32>
    %cst_11 = arith.constant dense<0xFF800000> : vector<24xf32>
    %37 = vector.multi_reduction <maximumf>, %36, %cst_11 [1] : vector<24x128xf32> to vector<24xf32>
    %38 = vector.shape_cast %37 : vector<24xf32> to vector<24x1xf32>
    %cst_12 = arith.constant 0.000000e+00 : f32
    %39 = vector.broadcast %cst_12 : f32 to vector<24x1xf32>
    %40 = arith.cmpf ogt, %34, %39 : vector<24x1xf32>
    %cst_13 = arith.constant 0.000000e+00 : f32
    %41 = vector.broadcast %cst_13 : f32 to vector<24x1xf32>
    %42 = arith.select %40, %38, %41 : vector<24x1xi1>, vector<24x1xf32>
    %43 = arith.addf %32, %42 : vector<24x1xf32>
    %44 = arith.select %40, %38, %33 : vector<24x1xi1>, vector<24x1xf32>
    %45 = arith.subf %2, %43 : vector<24x1xf32>
    %cst_14 = arith.constant 1.000000e+00 : f32
    %46 = vector.broadcast %cst_14 : f32 to vector<24x1xf32>
    %47 = arith.mulf %46, %45 : vector<24x1xf32>
    %48 = arith.subf %4, %44 : vector<24x1xf32>
    %49 = arith.addf %47, %48 : vector<24x1xf32>
    %50 = tpu.iota {dimensions = array<i32: 0>} : vector<24x1xi32>
    %c24_i32 = arith.constant 24 : i32
    %51 = arith.muli %arg0, %c24_i32 : i32
    %52 = vector.broadcast %51 : i32 to vector<24x1xi32>
    %53 = arith.addi %52, %50 : vector<24x1xi32>
    %c20_i32 = arith.constant 20 : i32
    %54 = vector.broadcast %c20_i32 : i32 to vector<24x1xi32>
    %55 = arith.cmpi slt, %53, %54 : vector<24x1xi32>
    %cst_15 = arith.constant 0.000000e+00 : f32
    %56 = vector.broadcast %cst_15 : f32 to vector<24x1xf32>
    %57 = arith.select %55, %49, %56 : vector<24x1xi1>, vector<24x1xf32>
    %c0_16 = arith.constant 0 : index
    %c0_17 = arith.constant 0 : index
    %58 = vector.load %arg2[%c0_16, %c0_17] : memref<24x1xf32, #tpu.memory_space<vmem>>, vector<24x1xf32>
    tpu.vector_store %arg2[%c0_16, %c0_17], %57 {strides = array<i32>} : memref<24x1xf32, #tpu.memory_space<vmem>>, vector<24x1xf32>,
    return
  }
  func.func @transform_0(%arg0: i32) -> (i32, i32) {
    %c0_i32 = arith.constant 0 : i32
    %c0_i32_0 = arith.constant 0 : i32
    return %arg0, %c0_i32 : i32, i32
  }
  func.func @transform_1(%arg0: i32) -> (i32, i32) {
    %c0_i32 = arith.constant 0 : i32
    %c0_i32_0 = arith.constant 0 : i32
    return %arg0, %c0_i32 : i32, i32
  }
}

</mosaic_0001>

<llo_original>
// kernel: tpu_custom_call.1
$region0: #{tpu_custom_call.1}
  #allocation0 [shape = 'u32[]', space=smem, size = 0x4, offset = 0x4, fixed_abs, tag = 'smem constant byte address 0x4 - core index']
  #allocation1 [shape = 'u32[144,128]{1,0:T(1,128)}', space=vmem, size = 0x12000, scoped, tag = 'internal scratch']
  %s0 = inlined_call_operand.hbm [shape: f32[20,128], index: 0, kind: input, shape index: {}]
  %s1 = inlined_call_operand.vmem [shape: f32[24,1], index: 1, kind: output, shape index: {}]
  %s2 = sld [smem:[#allocation0]]
  $region18: #{tpu_custom_call.1} parent=0
    _
  %s4 = ssub.s32 1, %s2
  %s5 = scalar_select 0, %s4, %s2
  $region1: #{tpu_custom_call.1} parent=0
    #allocation2 [shape = 'u8[12288]{0}', space=vmem, size = 0x3000, scoped, tag = 'input window, operand 0, single buffered']
    #allocation3 [shape = 's32[1]{0}', space=sflag, size = 0x4, scoped, tag = 'scoped memory for tpu_custom_call.1']
    %6 = vsyncpa [#allocation3], 0
    // Predicated region
    $region2: #{tpu_custom_call.1} parent=1 // pred_check
      _
    $region3: #{tpu_custom_call.1} parent=1 // pred_check_branch
      %8 = sbr.rel (0) target = $region5
    $region4: #{tpu_custom_call.1} parent=1 // pred_region
      %s10 = ssub.s32 384, 384
      %11 = vsyncadd [#allocation3], %s10
      %s12 = sshll.u32 [#allocation2], 4
      %s13 = int_to_ptr.vmem [resolvable:$true] %s12
      %18 = dma.hbm_to_vmem [thread:$0]  %s0, 384, %s13, [#allocation3], 128, 128, 8
    $region5: #{tpu_custom_call.1} parent=1 // pred_fallthru
      _
    // Predicated region
    $region6: #{tpu_custom_call.1} parent=1 // pred_check
      _
    $region7: #{tpu_custom_call.1} parent=1 // pred_check_branch
      %20 = sbr.rel (0) target = $region9
    $region8: #{tpu_custom_call.1} parent=1 // pred_region
      %21 = dma.done [#allocation3], 384
    $region9: #{tpu_custom_call.1} parent=1 // pred_fallthru
      _
    %v22 = vld [vmem:[#allocation2] sm:$0xff]
    %v23 = vld [vmem:[#allocation2 + $0x8] sm:$0xff]
    %v24 = vld [vmem:[#allocation2 + $0x10] sm:$0xff]
    %25 = vadd.xlane.f32.xlu0 %v22
    %v26 = vpop.xlane.xlu0 %25
    %27 = vadd.xlane.f32.xlu0 %v23
    %v28 = vpop.xlane.xlu0 %27
    %29 = vadd.xlane.f32.xlu0 %v24
    %v30 = vpop.xlane.xlu0 %29
    %31 = vmax.xlane.f32.xlu0 %v22
    %v32 = vpop.xlane.xlu0 %31
    %33 = vmax.xlane.f32.xlu0 %v23
    %v34 = vpop.xlane.xlu0 %33
    %35 = vmax.xlane.f32.xlu0 %v24
    %v36 = vpop.xlane.xlu0 %35
    %vm37 = vcmp.eq.f32.partialorder %v22, %v32
    %vm38 = vcmp.eq.f32.partialorder %v23, %v34
    %vm39 = vcmp.eq.f32.partialorder %v24, %v36
    %v40 = vsel %vm37, 1, 0
    %v41 = vsel %vm38, 1, 0
    %v42 = vsel %vm39, 1, 0
    %v43 = vcvt.s32.f32 %v40
    %v44 = vcvt.s32.f32 %v41
    %v45 = vcvt.s32.f32 %v42
    %46 = vadd.xlane.f32.xlu0 %v43
    %v47 = vpop.xlane.xlu0 %46
    %48 = vadd.xlane.f32.xlu0 %v44
    %v49 = vpop.xlane.xlu0 %48
    %50 = vadd.xlane.f32.xlu0 %v45
    %v51 = vpop.xlane.xlu0 %50
    %v52 = vmin.f32 %v47, 3.0
    %v53 = vmin.f32 %v49, 3.0
    %v54 = vmin.f32 %v51, 3.0
    %v55 = vmul.f32 %v52, %v32
    %v56 = vmul.f32 %v53, %v34
    %v57 = vmul.f32 %v54, %v36
    %v58 = vsub.f32 3.0, %v52
    %v59 = vsub.f32 3.0, %v53
    %v60 = vsub.f32 3.0, %v54
    %v61 = vsel %vm37, -inf, %v22
    %v62 = vsel %vm38, -inf, %v23
    %v63 = vsel %vm39, -inf, %v24
    %64 = vmax.xlane.f32.xlu0 %v61
    %v65 = vpop.xlane.xlu0 %64
    %66 = vmax.xlane.f32.xlu0 %v62
    %v67 = vpop.xlane.xlu0 %66
    %68 = vmax.xlane.f32.xlu0 %v63
    %v69 = vpop.xlane.xlu0 %68
    %vm70 = vcmp.eq.f32.partialorder %v61, %v65
    %vm71 = vcmp.eq.f32.partialorder %v62, %v67
    %vm72 = vcmp.eq.f32.partialorder %v63, %v69
    %v73 = vsel %vm70, 1, 0
    %v74 = vsel %vm71, 1, 0
    %v75 = vsel %vm72, 1, 0
    %v76 = vcvt.s32.f32 %v73
    %v77 = vcvt.s32.f32 %v74
    %v78 = vcvt.s32.f32 %v75
    %79 = vadd.xlane.f32.xlu0 %v76
    %v80 = vpop.xlane.xlu0 %79
    %81 = vadd.xlane.f32.xlu0 %v77
    %v82 = vpop.xlane.xlu0 %81
    %83 = vadd.xlane.f32.xlu0 %v78
    %v84 = vpop.xlane.xlu0 %83
    %v85 = vmin.f32 %v80, %v58
    %v86 = vmin.f32 %v82, %v59
    %v87 = vmin.f32 %v84, %v60
    %vm88 = vcmp.gt.f32.partialorder %v58, 0.0
    %vm89 = vcmp.gt.f32.partialorder %v59, 0.0
    %vm90 = vcmp.gt.f32.partialorder %v60, 0.0
    %v91 = vmul.f32 %v85, %v65
    %v92 = vmul.f32 %v86, %v67
    %v93 = vmul.f32 %v87, %v69
    %v94 = vsel %vm88, %v91, 0.0
    %v95 = vsel %vm89, %v92, 0.0
    %v96 = vsel %vm90, %v93, 0.0
    %v97 = vadd.f32 %v55, %v94
    %v98 = vadd.f32 %v56, %v95
    %v99 = vadd.f32 %v57, %v96
    %v100 = vsel %vm88, %v65, %v32
    %v101 = vsel %vm89, %v67, %v34
    %v102 = vsel %vm90, %v69, %v36
    %v103 = vsub.f32 %v58, %v85
    %v104 = vsub.f32 %v59, %v86
    %v105 = vsub.f32 %v60, %v87
    %v106 = vsel %vm70, -inf, %v61
    %v107 = vsel %vm71, -inf, %v62
    %v108 = vsel %vm72, -inf, %v63
    %109 = vmax.xlane.f32.xlu0 %v106
    %v110 = vpop.xlane.xlu0 %109
    %111 = vmax.xlane.f32.xlu0 %v107
    %v112 = vpop.xlane.xlu0 %111
    %113 = vmax.xlane.f32.xlu0 %v108
    %v114 = vpop.xlane.xlu0 %113
    %vm115 = vcmp.gt.f32.partialorder %v103, 0.0
    %vm116 = vcmp.gt.f32.partialorder %v104, 0.0
    %vm117 = vcmp.gt.f32.partialorder %v105, 0.0
    %v118 = vsel %vm115, %v110, 0.0
    %v119 = vsel %vm116, %v112, 0.0
    %v120 = vsel %vm117, %v114, 0.0
    %v121 = vadd.f32 %v97, %v118
    %v122 = vadd.f32 %v98, %v119
    %v123 = vadd.f32 %v99, %v120
    %v124 = vsel %vm115, %v110, %v100
    %v125 = vsel %vm116, %v112, %v101
    %v126 = vsel %vm117, %v114, %v102
    %v127 = vsub.f32 %v26, %v121
    %v128 = vsub.f32 %v28, %v122
    %v129 = vsub.f32 %v30, %v123
    %v130 = vsub.f32 %v32, %v124
    %v131 = vsub.f32 %v34, %v125
    %v132 = vsub.f32 %v36, %v126
    %v133 = vadd.f32 %v127, %v130
    %v134 = vadd.f32 %v128, %v131
    %v135 = vadd.f32 %v129, %v132
    %v136 = vlaneseq
    %v137 = vshrl.u32 %v136, 7
    %v138 = vadd.s32 %v137, 8
    %v139 = vadd.s32 %v137, 16
    %s140 = smul.u32 0, 24
    %v141 = vstv %s140
    %v142 = vadd.s32 %v141, %v137
    %v143 = vadd.s32 %v141, %v138
    %v144 = vadd.s32 %v141, %v139
    %vm145 = vcmp.lt.s32.totalorder %v142, 20
    %vm146 = vcmp.lt.s32.totalorder %v143, 20
    %vm147 = vcmp.lt.s32.totalorder %v144, 20
    %v148 = vsel %vm145, %v133, 0.0
    %v149 = vsel %vm146, %v134, 0.0
    %v150 = vsel %vm147, %v135, 0.0
    %vm151 = vcmask 7168
    %152 = vst.msk [vmem:[%s1] sm:$0xff] %vm151, %v148
    %153 = vst.msk [vmem:[%s1 + $0x8] sm:$0xff] %vm151, %v149
    %154 = vst.msk [vmem:[%s1 + $0x10] sm:$0xff] %vm151, %v150
    // Predicated region
    $region10: #{tpu_custom_call.1} parent=1 // pred_check
      _
    $region11: #{tpu_custom_call.1} parent=1 // pred_check_branch
      %156 = sbr.rel (0) target = $region13
    $region12: #{tpu_custom_call.1} parent=1 // pred_region
      _
    $region13: #{tpu_custom_call.1} parent=1 // pred_fallthru
      _
    // Predicated region
    $region14: #{tpu_custom_call.1} parent=1 // pred_check
      _
    $region15: #{tpu_custom_call.1} parent=1 // pred_check_branch
      %158 = sbr.rel (0) target = $region17
    $region16: #{tpu_custom_call.1} parent=1 // pred_region
      _
    $region17: #{tpu_custom_call.1} parent=1 // pred_fallthru
      _
    %159 = vsyncpa [#allocation3], 1

</llo_original>
